<compile_context>
chip_gen: v6e
topology: v6e:2x2x1
jax: 0.10.0
libtpu: 0.0.40
codegen_flags: <defaults>
</compile_context>

<pallas_src>
import functools

import jax
import jax.numpy as jnp
from jax.experimental import pallas as pl
from jax.experimental.pallas import tpu as pltpu

LN_EPS = 1e-5  # nn.LayerNorm default eps
_MiB = 1024 * 1024
_LANE = 128


def _round_up(v, m):
    return ((v + m - 1) // m) * m


def _vmem_limit_bytes():
    """Scoped-VMEM limit: cap - 12 MiB headroom, clamped to [32, 100] MiB."""
    try:
        cap = int(pltpu.get_tpu_info().vmem_capacity_bytes)
    except Exception:
        return None
    return max(32 * _MiB, min(100 * _MiB, cap - 12 * _MiB))


def _default_tile_rows():
    limit = _vmem_limit_bytes()
    if limit is not None and limit >= 96 * _MiB:
        return 512   # 128 MiB-VMEM parts (v5e / v6e): amortize per-step overhead
    return 256       # v7x: 64 MiB / TensorCore


def _compiler_params(grid_rank):
    kwargs = dict(dimension_semantics=("parallel",) * grid_rank)
    limit = _vmem_limit_bytes()
    if limit is not None:
        kwargs["vmem_limit_bytes"] = limit
    return pltpu.CompilerParams(**kwargs)


def _linear_layer_kernel(x_ref, g_ref, beta_ref, w_ref, b_ref, o_ref, *,
                         layer_norm: bool, relu: bool):
    # x_ref:    (tm, Din)   input row tile
    # g_ref:    (1, Din)    LayerNorm gamma
    # beta_ref: (1, Din)    LayerNorm beta
    # w_ref:    (Din, tn)   Linear weight slab (pre-transposed, bf16)
    # b_ref:    (1, tn)     Linear bias slab
    xf = x_ref[...].astype(jnp.float32)

    if layer_norm:
        # Two-pass statistics (matches PyTorch; no E[x^2]-E[x]^2 cancellation),
        # normalize + affine + MXU-dtype cast fused into one expression.
        mean = jnp.mean(xf, axis=-1, keepdims=True)
        centered = xf - mean
        var = jnp.mean(centered * centered, axis=-1, keepdims=True)
        inv = jax.lax.rsqrt(var + LN_EPS)
        h = ((centered * inv) * g_ref[...].astype(jnp.float32)
             + beta_ref[...].astype(jnp.float32)).astype(w_ref.dtype)
    else:
        h = xf.astype(w_ref.dtype)

    # nn.Dropout is identity in eval mode.
    # bf16 x bf16 -> f32 accumulation on the MXU.
    y = jnp.dot(h, w_ref[...], preferred_element_type=jnp.float32)
    y = y + b_ref[...].astype(jnp.float32)
    if relu:
        y = jnp.maximum(y, 0.0)
    o_ref[...] = y.astype(o_ref.dtype)


def prepare_linear_params(w, b, *, weight_dtype=jnp.bfloat16):
    """One-time parameter prep (call at load time, not per forward):
    transpose nn.Linear weight (Dout, Din) -> (Din, Dout), cast to the
    MXU-native dtype, and zero-pad Dout to a multiple of 128 so the kernel's
    output block is lane-dense (unmasked stores)."""
    Dout, Din = w.shape
    Dout_p = _round_up(Dout, _LANE)
    w_io = jnp.asarray(w.T, dtype=weight_dtype)       # (Din, Dout)
    b_p = jnp.asarray(b, dtype=jnp.float32)
    if Dout_p != Dout:
        w_io = jnp.pad(w_io, ((0, 0), (0, Dout_p - Dout)))
        b_p = jnp.pad(b_p, (0, Dout_p - Dout))
    return w_io, b_p


def linear_layer(x, gamma, beta, w_io, b, *, out_features=None,
                 tm=None, tn=None, layer_norm=True, relu=True, out_dtype=None):
    """Fused LayerNorm -> Dropout(eval) -> Linear -> ReLU.

    x:           (N, L, Din)
    gamma, beta: (Din,)          LayerNorm affine parameters
    w_io:        (Din, Dout_p)   weight from prepare_linear_params (bf16, lane-padded)
    b:           (Dout_p,)       bias from prepare_linear_params
    out_features: true Dout (before lane padding); defaults to Dout_p
    returns      (N, L, out_features)
    """
    N, L, Din = x.shape
    Din_w, Dout_p = w_io.shape
    assert Din_w == Din, "weight in_features mismatch"
    Dout = out_features if out_features is not None else Dout_p
    out_dtype = out_dtype or x.dtype
    rows = N * L

    # --- row tile -----------------------------------------------------------
    if tm is None:
        tm = _default_tile_rows()
    tm = max(8, (tm // 8) * 8)
    tm = min(tm, _round_up(rows, 8))          # don't tile past the actual rows
    if rows > 256 and pl.cdiv(rows, tm) < 2:  # keep >=2 steps for megacore
        tm = _round_up(pl.cdiv(rows, 2), 8)

    # --- output-column tile (weight residency budget) ------------------------
    if tn is None:
        limit = _vmem_limit_bytes() or (32 * _MiB)
        w_budget = limit // 3                                   # weight share of VMEM
        bytes_per_col = Din * jnp.dtype(w_io.dtype).itemsize * 2  # incl. double buffer
        tn_max = max(_LANE, (w_budget // bytes_per_col) // _LANE * _LANE)
        tn = min(Dout_p, tn_max)

    grid = (pl.cdiv(rows, tm), pl.cdiv(Dout_p, tn))

    x2d = x.reshape(rows, Din)
    g2d = gamma.reshape(1, Din)
    beta2d = beta.reshape(1, Din)
    b2d = b.reshape(1, Dout_p)

    kernel = functools.partial(_linear_layer_kernel,
                               layer_norm=layer_norm, relu=relu)

    grid_spec = pltpu.PrefetchScalarGridSpec(
        num_scalar_prefetch=0,
        grid=grid,
        in_specs=[
            pl.BlockSpec((tm, Din), lambda i, j: (i, 0)),    # x row tile (reused over j)
            pl.BlockSpec((1, Din), lambda i, j: (0, 0)),     # LN gamma
            pl.BlockSpec((1, Din), lambda i, j: (0, 0)),     # LN beta
            pl.BlockSpec((Din, tn), lambda i, j: (0, j)),    # weight slab
            pl.BlockSpec((1, tn), lambda i, j: (0, j)),      # bias slab
        ],
        out_specs=pl.BlockSpec((tm, tn), lambda i, j: (i, j)),
    )

    out2d = pl.pallas_call(
        kernel,
        out_shape=jax.ShapeDtypeStruct((rows, Dout_p), out_dtype),
        grid_spec=grid_spec,
        compiler_params=_compiler_params(len(grid)),
    )(x2d, g2d, beta2d, w_io, b2d)

    if Dout != Dout_p:
        out2d = out2d[:, :Dout]
    return out2d.reshape(N, L, Dout)


# ---------------------------------------------------------------------------
# Pure-JAX references
# ---------------------------------------------------------------------------
def reference_f32(x, gamma, beta, w, b):
    """Full-f32 reference with PyTorch-layout weight w: (Dout, Din)."""
    mean = jnp.mean(x, axis=-1, keepdims=True)
    var = jnp.mean(jnp.square(x - mean), axis=-1, keepdims=True)
    xn = (x - mean) * jax.lax.rsqrt(var + LN_EPS) * gamma + beta
    y = jnp.einsum("nld,od->nlo", xn, w) + b          # Dropout = identity (eval)
    return jnp.maximum(y, 0.0)


def reference_bf16(x, gamma, beta, w, b):
    """Reference mirroring the kernel's bf16 matmul / f32 accumulation."""
    mean = jnp.mean(x, axis=-1, keepdims=True)
    var = jnp.mean(jnp.square(x - mean), axis=-1, keepdims=True)
    xn = (x - mean) * jax.lax.rsqrt(var + LN_EPS) * gamma + beta
    y = jnp.dot(xn.astype(jnp.bfloat16), w.T.astype(jnp.bfloat16),
                preferred_element_type=jnp.float32) + b
    return jnp.maximum(y, 0.0)


if __name__ == "__main__":
    # Small config consistent with the module: batch=2, seq=8, in=32, out=64.
    # (Note: at these tiny Din/Dout a standalone kernel is mem-bound and XLA
    #  fusion would do as well — the kernel targets realistic hidden sizes.)
    N, L, Din, Dout = 2, 8, 32, 64
    key = jax.random.PRNGKey(0)
    kx, kw, kb, kg, kbe = jax.random.split(key, 5)

    x = jax.random.normal(kx, (N, L, Din), dtype=jnp.float32)

    # Parameters in PyTorch layout (nn.Linear weight is (out, in)).
    w = jax.random.normal(kw, (Dout, Din), dtype=jnp.float32) * (1.0 / jnp.sqrt(1.0 * Din))
    b = jax.random.normal(kb, (Dout,), dtype=jnp.float32) * 0.01
    gamma = 1.0 + 0.1 * jax.random.normal(kg, (Din,), dtype=jnp.float32)
    beta = 0.1 * jax.random.normal(kbe, (Din,), dtype=jnp.float32)

    # One-time parameter prep: transpose + bf16 cast + lane-pad Dout.
    w_io, b_p = prepare_linear_params(w, b)

    out = linear_layer(x, gamma, beta, w_io, b_p, out_features=Dout)
    out = jax.block_until_ready(out)
    assert out.shape == (N, L, Dout)

    ref_lo = reference_bf16(x, gamma, beta, w, b)   # mirrors kernel precision
    ref_hi = reference_f32(x, gamma, beta, w, b)    # full-precision sanity check
    assert jnp.allclose(out, ref_lo, atol=1e-2, rtol=2e-2), "mismatch vs bf16 reference"
    assert jnp.allclose(out, ref_hi, atol=6e-2, rtol=5e-2), "mismatch vs f32 reference"

    print("KERNEL_OK")
</pallas_src>

<mosaic_0001>
module attributes {stable_mosaic.version = 11 : i64} {
  func.func @_linear_layer_kernel(%arg0: i32, %arg1: i32, %arg2: memref<16x32xf32, #tpu.memory_space<vmem>>, %arg3: memref<1x32xf32, #tpu.memory_space<vmem>>, %arg4: memref<1x32xf32, #tpu.memory_space<vmem>>, %arg5: memref<32x128xbf16, #tpu.memory_space<vmem>>, %arg6: memref<1x128xf32, #tpu.memory_space<vmem>>, %arg7: memref<16x128xf32, #tpu.memory_space<vmem>>) attributes {dimension_semantics = [#tpu.dimension_semantics<parallel>, #tpu.dimension_semantics<parallel>], iteration_bounds = array<i64: 1, 1>, scalar_prefetch = 0 : i64, scratch_operands = 0 : i64, tpu.core_type = #tpu.core_type<tc>, window_params = [{transform_indices = @transform_0, window_bounds = array<i64: 16, 32>}, {pipeline_mode = #tpu.pipeline_mode<synchronous>, transform_indices = @transform_1, window_bounds = array<i64: 1, 32>}, {pipeline_mode = #tpu.pipeline_mode<synchronous>, transform_indices = @transform_2, window_bounds = array<i64: 1, 32>}, {transform_indices = @transform_3, window_bounds = array<i64: 32, 128>}, {transform_indices = @transform_4, window_bounds = array<i64: 1, 128>}, {transform_indices = @transform_5, window_bounds = array<i64: 16, 128>}]} {
    %c0 = arith.constant 0 : index
    %c0_0 = arith.constant 0 : index
    %0 = vector.load %arg2[%c0, %c0_0] : memref<16x32xf32, #tpu.memory_space<vmem>>, vector<16x32xf32>
    %cst = arith.constant dense<0.000000e+00> : vector<16xf32>
    %1 = vector.multi_reduction <add>, %0, %cst [1] : vector<16x32xf32> to vector<16xf32>
    %2 = vector.shape_cast %1 : vector<16xf32> to vector<16x1xf32>
    %cst_1 = arith.constant 3.200000e+01 : f32
    %3 = vector.broadcast %cst_1 : f32 to vector<16x1xf32>
    %4 = arith.divf %2, %3 : vector<16x1xf32>
    %5 = vector.broadcast %4 : vector<16x1xf32> to vector<16x32xf32>
    %6 = arith.subf %0, %5 : vector<16x32xf32>
    %7 = arith.mulf %6, %6 : vector<16x32xf32>
    %cst_2 = arith.constant dense<0.000000e+00> : vector<16xf32>
    %8 = vector.multi_reduction <add>, %7, %cst_2 [1] : vector<16x32xf32> to vector<16xf32>
    %9 = vector.shape_cast %8 : vector<16xf32> to vector<16x1xf32>
    %cst_3 = arith.constant 3.200000e+01 : f32
    %10 = vector.broadcast %cst_3 : f32 to vector<16x1xf32>
    %11 = arith.divf %9, %10 : vector<16x1xf32>
    %cst_4 = arith.constant 9.99999974E-6 : f32
    %12 = vector.broadcast %cst_4 : f32 to vector<16x1xf32>
    %13 = arith.addf %11, %12 : vector<16x1xf32>
    %14 = math.rsqrt %13 : vector<16x1xf32>
    %15 = vector.broadcast %14 : vector<16x1xf32> to vector<16x32xf32>
    %16 = arith.mulf %6, %15 : vector<16x32xf32>
    %c0_5 = arith.constant 0 : index
    %c0_6 = arith.constant 0 : index
    %17 = vector.load %arg3[%c0_5, %c0_6] : memref<1x32xf32, #tpu.memory_space<vmem>>, vector<1x32xf32>
    %18 = vector.broadcast %17 : vector<1x32xf32> to vector<16x32xf32>
    %19 = arith.mulf %16, %18 : vector<16x32xf32>
    %c0_7 = arith.constant 0 : index
    %c0_8 = arith.constant 0 : index
    %20 = vector.load %arg4[%c0_7, %c0_8] : memref<1x32xf32, #tpu.memory_space<vmem>>, vector<1x32xf32>
    %21 = vector.broadcast %20 : vector<1x32xf32> to vector<16x32xf32>
    %22 = arith.addf %19, %21 : vector<16x32xf32>
    %23 = arith.truncf %22 : vector<16x32xf32> to vector<16x32xbf16>
    %c0_9 = arith.constant 0 : index
    %c0_10 = arith.constant 0 : index
    %24 = vector.load %arg5[%c0_9, %c0_10] : memref<32x128xbf16, #tpu.memory_space<vmem>>, vector<32x128xbf16>
    %cst_11 = arith.constant dense<0.000000e+00> : vector<16x128xf32>
    %25 = tpu.matmul %23, %24, %cst_11 {dimension_numbers = #tpu.dot_dimension_numbers<[1], [0], [0], [1], [0, 0, 1, 1], [], []>} : vector<16x32xbf16>, vector<32x128xbf16>, vector<16x128xf32> -> vector<16x128xf32>
    %c0_12 = arith.constant 0 : index
    %c0_13 = arith.constant 0 : index
    %26 = vector.load %arg6[%c0_12, %c0_13] : memref<1x128xf32, #tpu.memory_space<vmem>>, vector<1x128xf32>
    %27 = vector.broadcast %26 : vector<1x128xf32> to vector<16x128xf32>
    %28 = arith.addf %25, %27 : vector<16x128xf32>
    %cst_14 = arith.constant 0.000000e+00 : f32
    %29 = vector.broadcast %cst_14 : f32 to vector<16x128xf32>
    %30 = arith.maximumf %28, %29 : vector<16x128xf32>
    %c0_15 = arith.constant 0 : index
    %c0_16 = arith.constant 0 : index
    %31 = vector.load %arg7[%c0_15, %c0_16] : memref<16x128xf32, #tpu.memory_space<vmem>>, vector<16x128xf32>
    tpu.vector_store %arg7[%c0_15, %c0_16], %30 {strides = array<i32>} : memref<16x128xf32, #tpu.memory_space<vmem>>, vector<16x128xf32>,
    return
  }
  func.func @transform_0(%arg0: i32, %arg1: i32) -> (i32, i32) {
    %c0_i32 = arith.constant 0 : i32
    %c0_i32_0 = arith.constant 0 : i32
    return %arg0, %c0_i32 : i32, i32
  }
  func.func @transform_1(%arg0: i32, %arg1: i32) -> (i32, i32) {
    %c0_i32 = arith.constant 0 : i32
    %c0_i32_0 = arith.constant 0 : i32
    %c0_i32_1 = arith.constant 0 : i32
    return %c0_i32, %c0_i32_0 : i32, i32
  }
  func.func @transform_2(%arg0: i32, %arg1: i32) -> (i32, i32) {
    %c0_i32 = arith.constant 0 : i32
    %c0_i32_0 = arith.constant 0 : i32
    %c0_i32_1 = arith.constant 0 : i32
    return %c0_i32, %c0_i32_0 : i32, i32
  }
  func.func @transform_3(%arg0: i32, %arg1: i32) -> (i32, i32) {
    %c0_i32 = arith.constant 0 : i32
    %c0_i32_0 = arith.constant 0 : i32
    return %c0_i32, %arg1 : i32, i32
  }
  func.func @transform_4(%arg0: i32, %arg1: i32) -> (i32, i32) {
    %c0_i32 = arith.constant 0 : i32
    %c0_i32_0 = arith.constant 0 : i32
    return %c0_i32, %arg1 : i32, i32
  }
  func.func @transform_5(%arg0: i32, %arg1: i32) -> (i32, i32) {
    %c0_i32 = arith.constant 0 : i32
    return %arg0, %arg1 : i32, i32
  }
}

</mosaic_0001>

<llo_original>
// kernel: tpu_custom_call.1
$region0: #{tpu_custom_call.1}
  #allocation0 [shape = 'u32[]', space=smem, size = 0x4, offset = 0x4, fixed_abs, tag = 'smem constant byte address 0x4 - core index']
  #allocation1 [shape = 'u32[144,128]{1,0:T(1,128)}', space=vmem, size = 0x12000, scoped, tag = 'internal scratch']
  %s0 = inlined_call_operand.hbm [shape: f32[16,32], index: 0, kind: input, shape index: {}]
  %s1 = inlined_call_operand.vmem [shape: f32[1,32], index: 1, kind: input, shape index: {}]
  %s2 = inlined_call_operand.vmem [shape: f32[1,32], index: 2, kind: input, shape index: {}]
  %s3 = inlined_call_operand.hbm [shape: bf16[32,128], index: 3, kind: input, shape index: {}]
  %s4 = inlined_call_operand.vmem [shape: f32[1,128], index: 4, kind: input, shape index: {}]
  %s5 = inlined_call_operand.hbm [shape: f32[16,128], index: 5, kind: output, shape index: {}]
  %s6 = sld [smem:[#allocation0]]
  $region38: #{tpu_custom_call.1} parent=0
    _
  %s8 = ssub.s32 1, %s6
  %s9 = scalar_select 0, %s8, %s6
  $region1: #{tpu_custom_call.1} parent=0
    #allocation2 [shape = 'u8[8192]{0}', space=vmem, size = 0x2000, scoped, tag = 'input window, operand 0, single buffered']
    #allocation3 [shape = 's32[1]{0}', space=sflag, size = 0x4, scoped, tag = 'scoped memory for tpu_custom_call.1']
    #allocation4 [shape = 's32[1]{0}', space=sflag, size = 0x4, scoped, tag = 'scoped memory for tpu_custom_call.1']
    #allocation5 [shape = 'u8[8192]{0}', space=vmem, size = 0x2000, scoped, tag = 'input window, operand 3, single buffered']
    #allocation6 [shape = 's32[1]{0}', space=sflag, size = 0x4, scoped, tag = 'scoped memory for tpu_custom_call.1']
    #allocation7 [shape = 'u8[8192]{0}', space=vmem, size = 0x2000, scoped, tag = 'output window, operand 0, single buffered']
    %10 = vsyncpa [#allocation3], 0
    %11 = vsyncpa [#allocation6], 0
    %12 = vsyncpa [#allocation4], 0
    // Predicated region
    $region2: #{tpu_custom_call.1} parent=1 // pred_check
      _
    $region3: #{tpu_custom_call.1} parent=1 // pred_check_branch
      %14 = sbr.rel (0) target = $region5
    $region4: #{tpu_custom_call.1} parent=1 // pred_region
      %s16 = ssub.s32 256, 256
      %17 = vsyncadd [#allocation3], %s16
      %s18 = sshll.u32 [#allocation2], 4
      %s19 = int_to_ptr.vmem [resolvable:$true] %s18
      %24 = dma.hbm_to_vmem [thread:$0]  %s0, 256, %s19, [#allocation3], 128, 128, 8
    $region5: #{tpu_custom_call.1} parent=1 // pred_fallthru
      _
    // Predicated region
    $region6: #{tpu_custom_call.1} parent=1 // pred_check
      _
    $region7: #{tpu_custom_call.1} parent=1 // pred_check_branch
      %26 = sbr.rel (0) target = $region9
    $region8: #{tpu_custom_call.1} parent=1 // pred_region
      _
    $region9: #{tpu_custom_call.1} parent=1 // pred_fallthru
      _
    // Predicated region
    $region10: #{tpu_custom_call.1} parent=1 // pred_check
      _
    $region11: #{tpu_custom_call.1} parent=1 // pred_check_branch
      %28 = sbr.rel (0) target = $region13
    $region12: #{tpu_custom_call.1} parent=1 // pred_region
      _
    $region13: #{tpu_custom_call.1} parent=1 // pred_fallthru
      _
    // Predicated region
    $region14: #{tpu_custom_call.1} parent=1 // pred_check
      _
    $region15: #{tpu_custom_call.1} parent=1 // pred_check_branch
      %30 = sbr.rel (0) target = $region17
    $region16: #{tpu_custom_call.1} parent=1 // pred_region
      %s32 = ssub.s32 256, 256
      %33 = vsyncadd [#allocation6], %s32
      %s34 = sshll.u32 [#allocation5], 4
      %s35 = int_to_ptr.vmem [resolvable:$true] %s34
      %40 = dma.hbm_to_vmem [thread:$0]  %s3, 256, %s35, [#allocation6], 64, 64, 4
    $region17: #{tpu_custom_call.1} parent=1 // pred_fallthru
      _
    // Predicated region
    $region18: #{tpu_custom_call.1} parent=1 // pred_check
      _
    $region19: #{tpu_custom_call.1} parent=1 // pred_check_branch
      %42 = sbr.rel (0) target = $region21
    $region20: #{tpu_custom_call.1} parent=1 // pred_region
      _
    $region21: #{tpu_custom_call.1} parent=1 // pred_fallthru
      _
    // Predicated region
    $region22: #{tpu_custom_call.1} parent=1 // pred_check
      _
    $region23: #{tpu_custom_call.1} parent=1 // pred_check_branch
      %44 = sbr.rel (0) target = $region25
    $region24: #{tpu_custom_call.1} parent=1 // pred_region
      %45 = dma.done [#allocation3], 256
    $region25: #{tpu_custom_call.1} parent=1 // pred_fallthru
      _
    // Predicated region
    $region26: #{tpu_custom_call.1} parent=1 // pred_check
      _
    $region27: #{tpu_custom_call.1} parent=1 // pred_check_branch
      %47 = sbr.rel (0) target = $region29
    $region28: #{tpu_custom_call.1} parent=1 // pred_region
      %48 = dma.done [#allocation6], 256
    $region29: #{tpu_custom_call.1} parent=1 // pred_fallthru
      _
    %v50 = vld [vmem:[#allocation2] sm:$0xff]
    %v51 = vld [vmem:[#allocation2 + $0x8] sm:$0xff]
    %vm52 = vcmask 261120
    %v53 = vsel %vm52, %v50, 0.0
    %54 = vadd.xlane.f32.xlu0 %v53
    %v55 = vpop.xlane.xlu0 %54
    %v56 = vsel %vm52, %v51, 0.0
    %57 = vadd.xlane.f32.xlu0 %v56
    %v58 = vpop.xlane.xlu0 %57
    %v59 = vrcp.pop 32.0
    %v60 = vmul.f32 %v55, %v59
    %v61 = vmul.f32 %v58, %v59
    %v62 = vsub.f32 %v50, %v60
    %v63 = vsub.f32 %v51, %v61
    %v64 = vmul.f32 %v62, %v62
    %v65 = vmul.f32 %v63, %v63
    %v66 = vsel %vm52, %v64, 0.0
    %67 = vadd.xlane.f32.xlu0 %v66
    %v68 = vpop.xlane.xlu0 %67
    %v69 = vsel %vm52, %v65, 0.0
    %70 = vadd.xlane.f32.xlu0 %v69
    %v71 = vpop.xlane.xlu0 %70
    %v72 = vmul.f32 %v68, %v59
    %v73 = vmul.f32 %v71, %v59
    %v74 = vadd.f32 %v72, 1e-05
    %v75 = vadd.f32 %v73, 1e-05
    %v76 = vrsqrt.pop %v74
    %v77 = vrsqrt.pop %v75
    %v78 = vmul.f32 %v62, %v76
    %v79 = vmul.f32 %v63, %v77
    %v80 = vld [vmem:[%s1] sm:$0x1]
    %v82 = vlaneseq
    %v83 = vshrl.u32 %v82, 7
    %v84 = vsub.s32 0, %v83
    %v85 = vrot.slane %v80, %v84
    %v87 = vmul.f32 %v78, %v85
    %v88 = vmul.f32 %v79, %v85
    %v89 = vld [vmem:[%s2] sm:$0x1]
    %v91 = vlaneseq
    %v92 = vshrl.u32 %v91, 7
    %v93 = vsub.s32 0, %v92
    %v94 = vrot.slane %v89, %v93
    %v96 = vadd.f32 %v87, %v94
    %v97 = vadd.f32 %v88, %v94
    %v98 = vpack.c.bf16 %v97, %v96
    %v99 = vld [vmem:[#allocation5] sm:$0xf]
    %v100 = vld [vmem:[#allocation5 + $0x4] sm:$0xf]
    %v101 = vld [vmem:[#allocation5 + $0x8] sm:$0xf]
    %v102 = vld [vmem:[#allocation5 + $0xc] sm:$0xf]
    %v103 = vld [vmem:[%s4] sm:$0x1]
    %v105 = vlaneseq
    %v106 = vshrl.u32 %v105, 7
    %v107 = vsub.s32 0, %v106
    %v108 = vrot.slane %v103, %v107
    %v114 = vunpack.c.l.b16 %v99
    %v115 = vunpack.c.l.b16 %v100
    %v116 = vunpack.c.l.b16 %v101
    %v117 = vunpack.c.l.b16 %v102
    %v118 = vpack.c.b16 %v115, %v114
    %v119 = vpack.c.b16 %v117, %v116
    %v123 = vsel %vm52, %v98, 0
    %125 = vmatprep.subr.bf16.mxu0 0
    %126 = vmatpush1.bf16.msra.mxu0 0
    %127 = vmatprep.subr.bf16.mxu0 0
    %128 = vmatpush1.bf16.msra.mxu0 0
    %129 = vmatprep.subr.bf16.mxu0 0
    %130 = vmatpush1.bf16.msra.mxu0 0
    %131 = vmatprep.subr.bf16.mxu0 0
    %132 = vmatpush1.bf16.msra.mxu0 0
    %133 = vmatprep.subr.bf16.mxu0 0
    %134 = vmatpush1.bf16.msra.mxu0 0
    %135 = vmatprep.subr.bf16.mxu0 0
    %136 = vmatpush1.bf16.msra.mxu0 0
    %137 = vmatprep.subr.bf16.mxu0 0
    %138 = vmatpush1.bf16.msra.mxu0 %v119
    %139 = vmatprep.subr.bf16.mxu0 0
    %140 = vmatpush1.bf16.msra.mxu0 %v118
    %141 = vmatprep.subr.bf16.mxu0 0
    %142 = vmatpush2.bf16.msra.mxu0 0
    %143 = vmatprep.subr.bf16.mxu0 0
    %144 = vmatpush2.bf16.msra.mxu0 0
    %145 = vmatprep.subr.bf16.mxu0 0
    %146 = vmatpush2.bf16.msra.mxu0 0
    %147 = vmatprep.subr.bf16.mxu0 0
    %148 = vmatpush2.bf16.msra.mxu0 0
    %149 = vmatprep.subr.bf16.mxu0 0
    %150 = vmatpush2.bf16.msra.mxu0 0
    %151 = vmatprep.subr.bf16.mxu0 0
    %152 = vmatpush2.bf16.msra.mxu0 0
    %153 = vmatprep.subr.bf16.mxu0 0
    %154 = vmatpush2.bf16.msra.mxu0 0
    %155 = vmatprep.subr.bf16.mxu0 0
    %156 = vmatpush2.bf16.msra.mxu0 0
    %157 = vmatprep.mubr.bf16.mxu0 0
    %158 = vmatmul.mubr.bf16.gmra.mxu0 %v123
    %v159 = vpop.f32.mrf.mxu0
    %v160 = vadd.f32 %v108, %v159
    %v161 = vpop.f32.mrf.mxu0
    %v162 = vpop.f32.mrf.mxu0
    %v163 = vadd.f32 %v108, %v162
    %v164 = vpop.f32.mrf.mxu0
    %165 = vdwg.mxu0
    %v166 = vmax.f32 %v160, 0.0
    %v167 = vmax.f32 %v163, 0.0
    %168 = vst [vmem:[#allocation7] sm:$0xff] %v166
    %169 = vst [vmem:[#allocation7 + $0x8] sm:$0xff] %v167
    // Predicated region
    $region30: #{tpu_custom_call.1} parent=1 // pred_check
      _
    $region31: #{tpu_custom_call.1} parent=1 // pred_check_branch
      %171 = sbr.rel (0) target = $region33
    $region32: #{tpu_custom_call.1} parent=1 // pred_region
      %s173 = ssub.s32 256, 256
      %174 = vsyncadd [#allocation4], %s173
      %s175 = sshll.u32 [#allocation7], 4
      %s176 = int_to_ptr.vmem [resolvable:$true] %s175
      %181 = dma.vmem_to_hbm [thread:$0]  %s176, 256, %s5, [#allocation4], 128, 128, 8
    $region33: #{tpu_custom_call.1} parent=1 // pred_fallthru
      _
    // Predicated region
    $region34: #{tpu_custom_call.1} parent=1 // pred_check
      _
    $region35: #{tpu_custom_call.1} parent=1 // pred_check_branch
      %183 = sbr.rel (0) target = $region37
    $region36: #{tpu_custom_call.1} parent=1 // pred_region
      %184 = dma.done [#allocation4], 256
    $region37: #{tpu_custom_call.1} parent=1 // pred_fallthru
      _
    %185 = vsyncpa [#allocation3], 1
    %186 = vsyncpa [#allocation6], 1
    %187 = vsyncpa [#allocation4], 1

</llo_original>
